<compile_context>
chip_gen: v5e
topology: v5e:2x2
jax: 0.10.0
libtpu: 0.0.40
codegen_flags: <defaults>
</compile_context>

<pallas_src>
import functools

import jax
import jax.numpy as jnp
from jax.experimental import pallas as pl
from jax.experimental.pallas import tpu as pltpu

_NEG_BIG = -1e30                      # effectively -inf for the masked log-sum-exp
_VMEM_TILE_BUDGET = 24 * 1024 * 1024  # conservative (fits v7x's smaller VMEM); v5e/v6e can go 2-4x
_VMEM_LIMIT_BYTES = 48 * 1024 * 1024


def _circle_loss_kernel(x_ref, w_ref, bias_ref, lab_ref,
                        loss_ref, pred_ref,
                        xlen_sc, xmxu_sc, m_sc, l_sc, tcos_sc, idx_sc,
                        *, margin, scale, class_tile, has_col_pad, mxu_dtype):
    k = pl.program_id(1)

    # ---- per-batch-tile init: row norms, MXU-dtype copy of x, accumulators ----
    @pl.when(k == 0)
    def _init():
        x = x_ref[...]                                               # (TB, D) f32
        xlen_sc[...] = jnp.sqrt(jnp.sum(x * x, axis=1, keepdims=True))
        xmxu_sc[...] = x.astype(mxu_dtype)
        m_sc[...] = jnp.full_like(m_sc, _NEG_BIG)
        l_sc[...] = jnp.zeros_like(l_sc)
        tcos_sc[...] = jnp.zeros_like(tcos_sc)
        idx_sc[...] = jnp.zeros_like(idx_sc)

    m = jnp.float32(margin)
    s = jnp.float32(scale)

    # ---- CosineLinearLayer: column L2-normalize folded into a post-matmul rescale ----
    w = w_ref[...]                                                   # (D, TC)
    w32 = w.astype(jnp.float32)
    col_sq = jnp.sum(w32 * w32, axis=0, keepdims=True)               # (1, TC)
    inv_wnorm = jnp.where(col_sq > 0.0, jax.lax.rsqrt(col_sq), 0.0)  # guard 0-norm columns

    dot = jnp.dot(xmxu_sc[...], w.astype(mxu_dtype),
                  preferred_element_type=jnp.float32)                # (TB, TC) on the MXU
    xlen = xlen_sc[...]                                              # (TB, 1)
    # clip(dot/(|x||w|), -1, 1) * |x|  ==  clip(dot/|w|, -|x|, +|x|)
    cosine = jnp.clip(dot * inv_wnorm, -xlen, xlen)                  # (TB, TC) f32 epilogue

    # ---- CircleCore logits for this class tile (sp_y per-row, not per-element) ----
    TB, TC = cosine.shape
    gids = jax.lax.broadcasted_iota(jnp.int32, (TB, TC), 1) + k * class_tile
    # Labels live in a (TB, 1) VMEM vector (not SMEM scalar-prefetch): they are
    # only needed for this vector compare, never for an index_map.
    is_target = gids == lab_ref[...]                                 # (TB, TC) bool

    tcos = jnp.sum(jnp.where(is_target, cosine, 0.0), axis=1, keepdims=True)  # (TB, 1)
    tcos_sc[...] += tcos                                             # exactly one tile contributes

    sp_j = jnp.maximum(cosine + m, 0.0) * (cosine - m)               # (TB, TC)
    sp_y = jnp.maximum(1.0 + m - tcos, 0.0) * (tcos - (1.0 - m))     # (TB, 1), row-wise
    logits = s * jnp.where(is_target, sp_y, sp_j)                    # (TB, TC)
    if has_col_pad:                                                  # compile-time skip
        logits = logits + bias_ref[...]                              # additive -1e30 on padded classes

    # ---- online max / argmax / log-sum-exp accumulation ----
    tile_max = jnp.max(logits, axis=1, keepdims=True)                # (TB, 1)
    m_old = m_sc[...]
    # first-occurrence (lowest global index) argmax within this tile, int32 throughout
    cand = jnp.min(jnp.where(logits >= tile_max, gids, 2 ** 30), axis=1, keepdims=True)
    idx_sc[...] = jnp.where(tile_max > m_old, cand, idx_sc[...])     # strict > keeps earlier ties
    m_new = jnp.maximum(m_old, tile_max)
    l_sc[...] = (l_sc[...] * jnp.exp(m_old - m_new)
                 + jnp.sum(jnp.exp(logits - m_new), axis=1, keepdims=True))
    m_sc[...] = m_new

    # ---- finalize: per-row CE loss and top-1 prediction (batch mean done by caller) ----
    @pl.when(k == pl.num_programs(1) - 1)
    def _finalize():
        lse = m_sc[...] + jnp.log(l_sc[...])
        t_c = tcos_sc[...]
        target_logit = s * jnp.maximum(1.0 + m - t_c, 0.0) * (t_c - (1.0 - m))
        loss_ref[...] = lse - target_logit
        pred_ref[...] = idx_sc[...]


def _round_up(v: int, mult: int) -> int:
    return ((v + mult - 1) // mult) * mult


def pad_classifier_weight(weight):
    """Pad the class axis to a multiple of 128.  Call ONCE at init, not per step:
    at production class counts, re-padding every forward is a full O(D*C) HBM copy."""
    _, c = weight.shape
    cp = _round_up(c, 128)
    if cp != c:
        weight = jnp.pad(weight, ((0, 0), (0, cp - c)))
    return weight


def _pick_class_tile(d: int, cp: int, tb: int, w_itemsize: int) -> int:
    """Largest class tile (multiple of 128 dividing cp) whose double-buffered W slab
    plus (TB, TC) f32 temporaries fits _VMEM_TILE_BUDGET.  The budget is sized so a
    2-deep pipeline fits v7x's 64 MiB VMEM; v5e/v6e (128 MiB) can raise it (and/or
    use pl.Buffered(3) on the W spec) for larger tiles."""
    per_col = 2 * d * w_itemsize + 8 + 32 * tb   # 2x W (double buffer) + bias + live temporaries
    cap = max(128, min(cp, 8192, (_VMEM_TILE_BUDGET // per_col) // 128 * 128))
    for cand in range(cap, 127, -128):
        if cp % cand == 0:
            return cand
    return 128


def circle_loss_forward(x, weight, labels, *, n_classes=None,
                        margin: float = 0.35, scale: float = 256.0,
                        mxu_dtype=jnp.bfloat16):
    """Forward pass of `LossFunction`: returns (loss, prec1).

    `weight` is (D, C) or pre-padded (D, Cp) with `n_classes=C` (production: store
    it pre-padded — and optionally in bf16 — via pad_classifier_weight).
    `mxu_dtype=jnp.float32` gives bit-closer parity with the f32 PyTorch reference."""
    b, d = x.shape
    dw, c_stored = weight.shape
    assert d == dw
    c = int(n_classes) if n_classes is not None else c_stored

    cp = c_stored
    if cp % 128 != 0:
        # Fallback for unpadded weights (demo path); avoid in production (see above).
        cp = _round_up(cp, 128)
        weight = jnp.pad(weight, ((0, 0), (0, cp - c_stored)))
    assert 0 < c <= cp

    tb = min(128, _round_up(b, 8))
    bp = _round_up(b, tb)
    tc = _pick_class_tile(d, cp, tb, jnp.dtype(mxu_dtype).itemsize)
    nb, nk = bp // tb, cp // tc
    has_col_pad = c != cp

    if x.dtype != jnp.float32:
        x = x.astype(jnp.float32)
    if bp != b:
        x = jnp.pad(x, ((0, bp - b), (0, 0)))
    lab = labels.astype(jnp.int32)
    if bp != b:
        lab = jnp.pad(lab, (0, bp - b))
    lab = lab.reshape(bp, 1)

    # Additive column mask (0 for real classes, -1e30 for lane padding).  Unused
    # (and the in-kernel add skipped) when the class count is already lane-aligned.
    if has_col_pad:
        col_bias = jnp.where(jnp.arange(cp) < c, 0.0, _NEG_BIG).astype(jnp.float32)
    else:
        col_bias = jnp.zeros((cp,), jnp.float32)
    col_bias = col_bias.reshape(1, cp)

    kernel = functools.partial(
        _circle_loss_kernel, margin=float(margin), scale=float(scale),
        class_tile=tc, has_col_pad=has_col_pad, mxu_dtype=mxu_dtype)

    grid_spec = pltpu.PrefetchScalarGridSpec(
        num_scalar_prefetch=0,
        grid=(nb, nk),
        in_specs=[
            pl.BlockSpec((tb, d), lambda bi, ki: (bi, 0)),   # x: resident per batch tile
            pl.BlockSpec((d, tc), lambda bi, ki: (0, ki)),   # W: streamed over class tiles
            pl.BlockSpec((1, tc), lambda bi, ki: (0, ki)),   # column-mask bias
            pl.BlockSpec((tb, 1), lambda bi, ki: (bi, 0)),   # labels
        ],
        out_specs=[
            pl.BlockSpec((tb, 1), lambda bi, ki: (bi, 0)),   # per-row CE loss (f32)
            pl.BlockSpec((tb, 1), lambda bi, ki: (bi, 0)),   # per-row argmax (int32)
        ],
        scratch_shapes=[
            pltpu.VMEM((tb, 1), jnp.float32),   # |x| per row
            pltpu.VMEM((tb, d), mxu_dtype),     # x cast once for the MXU
            pltpu.VMEM((tb, 1), jnp.float32),   # running max
            pltpu.VMEM((tb, 1), jnp.float32),   # running sum of exp
            pltpu.VMEM((tb, 1), jnp.float32),   # target-class cosine
            pltpu.VMEM((tb, 1), jnp.int32),     # running argmax index
        ],
    )

    loss_rows, preds = pl.pallas_call(
        kernel,
        out_shape=(jax.ShapeDtypeStruct((bp, 1), jnp.float32),
                   jax.ShapeDtypeStruct((bp, 1), jnp.int32)),
        grid_spec=grid_spec,
        compiler_params=pltpu.CompilerParams(
            dimension_semantics=("parallel", "arbitrary"),
            vmem_limit_bytes=_VMEM_LIMIT_BYTES),
    )(x, weight, col_bias, lab)

    # O(B) finalize outside the kernel (keeps the batch grid axis "parallel").
    loss = jnp.mean(loss_rows[:b, 0])
    prec1 = 100.0 * jnp.mean((preds[:b, 0] == labels.astype(jnp.int32)).astype(jnp.float32))
    # TODO(synk): the torch helper also computes top-5 accuracy but the module
    # discards it (`prec1, _ = ...`), so only top-1 is produced here.
    return loss, prec1


if __name__ == "__main__":
    key = jax.random.PRNGKey(0)
    k_x, k_w, k_l = jax.random.split(key, 3)

    B = 8          # batch
    nOut = 32      # embedding dim (in_features)
    nClasses = 16  # number of classes (out_features), >= 5 for the topk=(1,5) contract

    x = jax.random.normal(k_x, (B, nOut), dtype=jnp.float32)
    # CosineLinearLayer init: uniform(-1, 1); the column normalization is re-applied
    # inside the kernel every forward, exactly like the PyTorch forward does.
    weight = jax.random.uniform(k_w, (nOut, nClasses), dtype=jnp.float32,
                                minval=-1.0, maxval=1.0)
    labels = jax.random.randint(k_l, (B,), 0, nClasses, dtype=jnp.int32)

    # One-time class-axis padding (production: keep the weight stored like this).
    w_padded = pad_classifier_weight(weight)

    loss, prec1 = circle_loss_forward(x, w_padded, labels, n_classes=nClasses,
                                      margin=0.35, scale=256.0)
    jax.block_until_ready((loss, prec1))
    print("KERNEL_OK")
</pallas_src>

<mosaic_0001>
module attributes {stable_mosaic.version = 11 : i64} {
  func.func @_circle_loss_kernel(%arg0: i32, %arg1: i32, %arg2: memref<8x32xf32, #tpu.memory_space<vmem>>, %arg3: memref<32x128xf32, #tpu.memory_space<vmem>>, %arg4: memref<1x128xf32, #tpu.memory_space<vmem>>, %arg5: memref<8x1xi32, #tpu.memory_space<vmem>>, %arg6: memref<8x1xf32, #tpu.memory_space<vmem>>, %arg7: memref<8x1xi32, #tpu.memory_space<vmem>>, %arg8: memref<8x1xf32, #tpu.memory_space<vmem>>, %arg9: memref<8x32xbf16, #tpu.memory_space<vmem>>, %arg10: memref<8x1xf32, #tpu.memory_space<vmem>>, %arg11: memref<8x1xf32, #tpu.memory_space<vmem>>, %arg12: memref<8x1xf32, #tpu.memory_space<vmem>>, %arg13: memref<8x1xi32, #tpu.memory_space<vmem>>) attributes {dimension_semantics = [#tpu.dimension_semantics<parallel>, #tpu.dimension_semantics<arbitrary>], iteration_bounds = array<i64: 1, 1>, scalar_prefetch = 0 : i64, scratch_operands = 6 : i64, tpu.core_type = #tpu.core_type<tc>, window_params = [{transform_indices = @transform_0, window_bounds = array<i64: 8, 32>}, {transform_indices = @transform_1, window_bounds = array<i64: 32, 128>}, {transform_indices = @transform_2, window_bounds = array<i64: 1, 128>}, {transform_indices = @transform_3, window_bounds = array<i64: 8, 1>}, {transform_indices = @transform_4, window_bounds = array<i64: 8, 1>}, {transform_indices = @transform_5, window_bounds = array<i64: 8, 1>}]} {
    %c0_i32 = arith.constant 0 : i32
    %0 = arith.cmpi eq, %arg1, %c0_i32 : i32
    %1 = arith.extui %0 : i1 to i32
    %c0_i32_0 = arith.constant 0 : i32
    %2 = arith.cmpi ne, %1, %c0_i32_0 : i32
    scf.if %2 {
      %c0_48 = arith.constant 0 : index
      %c0_49 = arith.constant 0 : index
      %91 = vector.load %arg2[%c0_48, %c0_49] : memref<8x32xf32, #tpu.memory_space<vmem>>, vector<8x32xf32>
      %92 = arith.mulf %91, %91 : vector<8x32xf32>
      %cst_50 = arith.constant dense<0.000000e+00> : vector<8xf32>
      %93 = vector.multi_reduction <add>, %92, %cst_50 [1] : vector<8x32xf32> to vector<8xf32>
      %94 = vector.shape_cast %93 : vector<8xf32> to vector<8x1xf32>
      %95 = math.sqrt %94 : vector<8x1xf32>
      %c0_51 = arith.constant 0 : index
      %c0_52 = arith.constant 0 : index
      %96 = vector.load %arg8[%c0_51, %c0_52] : memref<8x1xf32, #tpu.memory_space<vmem>>, vector<8x1xf32>
      tpu.vector_store %arg8[%c0_51, %c0_52], %95 {strides = array<i32>} : memref<8x1xf32, #tpu.memory_space<vmem>>, vector<8x1xf32>,
      %97 = arith.truncf %91 : vector<8x32xf32> to vector<8x32xbf16>
      %c0_53 = arith.constant 0 : index
      %c0_54 = arith.constant 0 : index
      %98 = vector.load %arg9[%c0_53, %c0_54] : memref<8x32xbf16, #tpu.memory_space<vmem>>, vector<8x32xbf16>
      tpu.vector_store %arg9[%c0_53, %c0_54], %97 {strides = array<i32>} : memref<8x32xbf16, #tpu.memory_space<vmem>>, vector<8x32xbf16>,
      %cst_55 = arith.constant -1.000000e+30 : f32
      %99 = vector.broadcast %cst_55 : f32 to vector<8x1xf32>
      %c0_56 = arith.constant 0 : index
      %c0_57 = arith.constant 0 : index
      %100 = vector.load %arg10[%c0_56, %c0_57] : memref<8x1xf32, #tpu.memory_space<vmem>>, vector<8x1xf32>
      tpu.vector_store %arg10[%c0_56, %c0_57], %99 {strides = array<i32>} : memref<8x1xf32, #tpu.memory_space<vmem>>, vector<8x1xf32>,
      %cst_58 = arith.constant 0.000000e+00 : f32
      %101 = vector.broadcast %cst_58 : f32 to vector<8x1xf32>
      %c0_59 = arith.constant 0 : index
      %c0_60 = arith.constant 0 : index
      %102 = vector.load %arg11[%c0_59, %c0_60] : memref<8x1xf32, #tpu.memory_space<vmem>>, vector<8x1xf32>
      tpu.vector_store %arg11[%c0_59, %c0_60], %101 {strides = array<i32>} : memref<8x1xf32, #tpu.memory_space<vmem>>, vector<8x1xf32>,
      %cst_61 = arith.constant 0.000000e+00 : f32
      %103 = vector.broadcast %cst_61 : f32 to vector<8x1xf32>
      %c0_62 = arith.constant 0 : index
      %c0_63 = arith.constant 0 : index
      %104 = vector.load %arg12[%c0_62, %c0_63] : memref<8x1xf32, #tpu.memory_space<vmem>>, vector<8x1xf32>
      tpu.vector_store %arg12[%c0_62, %c0_63], %103 {strides = array<i32>} : memref<8x1xf32, #tpu.memory_space<vmem>>, vector<8x1xf32>,
      %c0_i32_64 = arith.constant 0 : i32
      %105 = vector.broadcast %c0_i32_64 : i32 to vector<8x1xi32>
      %c0_65 = arith.constant 0 : index
      %c0_66 = arith.constant 0 : index
      %106 = vector.load %arg13[%c0_65, %c0_66] : memref<8x1xi32, #tpu.memory_space<vmem>>, vector<8x1xi32>
      tpu.vector_store %arg13[%c0_65, %c0_66], %105 {strides = array<i32>} : memref<8x1xi32, #tpu.memory_space<vmem>>, vector<8x1xi32>,
    } else {
    }
    %c0 = arith.constant 0 : index
    %c0_1 = arith.constant 0 : index
    %3 = vector.load %arg3[%c0, %c0_1] : memref<32x128xf32, #tpu.memory_space<vmem>>, vector<32x128xf32>
    %4 = arith.mulf %3, %3 : vector<32x128xf32>
    %cst = arith.constant dense<0.000000e+00> : vector<128xf32>
    %5 = vector.multi_reduction <add>, %4, %cst [0] : vector<32x128xf32> to vector<128xf32>
    %6 = vector.shape_cast %5 : vector<128xf32> to vector<1x128xf32>
    %cst_2 = arith.constant 0.000000e+00 : f32
    %7 = vector.broadcast %cst_2 : f32 to vector<1x128xf32>
    %8 = arith.cmpf ogt, %6, %7 : vector<1x128xf32>
    %9 = math.rsqrt %6 : vector<1x128xf32>
    %cst_3 = arith.constant 0.000000e+00 : f32
    %10 = vector.broadcast %cst_3 : f32 to vector<1x128xf32>
    %11 = arith.select %8, %9, %10 : vector<1x128xi1>, vector<1x128xf32>
    %c0_4 = arith.constant 0 : index
    %c0_5 = arith.constant 0 : index
    %12 = vector.load %arg9[%c0_4, %c0_5] : memref<8x32xbf16, #tpu.memory_space<vmem>>, vector<8x32xbf16>
    %13 = arith.truncf %3 : vector<32x128xf32> to vector<32x128xbf16>
    %cst_6 = arith.constant dense<0.000000e+00> : vector<8x128xf32>
    %14 = tpu.matmul %12, %13, %cst_6 {dimension_numbers = #tpu.dot_dimension_numbers<[1], [0], [0], [1], [0, 0, 1, 1], [], []>} : vector<8x32xbf16>, vector<32x128xbf16>, vector<8x128xf32> -> vector<8x128xf32>
    %c0_7 = arith.constant 0 : index
    %c0_8 = arith.constant 0 : index
    %15 = vector.load %arg8[%c0_7, %c0_8] : memref<8x1xf32, #tpu.memory_space<vmem>>, vector<8x1xf32>
    %16 = vector.broadcast %11 : vector<1x128xf32> to vector<8x128xf32>
    %17 = arith.mulf %14, %16 : vector<8x128xf32>
    %cst_9 = arith.constant 0.000000e+00 : f32
    %18 = vector.broadcast %cst_9 : f32 to vector<8x1xf32>
    %19 = arith.subf %18, %15 : vector<8x1xf32>
    %20 = vector.broadcast %19 : vector<8x1xf32> to vector<8x128xf32>
    %21 = arith.maximumf %20, %17 : vector<8x128xf32>
    %22 = vector.broadcast %15 : vector<8x1xf32> to vector<8x128xf32>
    %23 = arith.minimumf %22, %21 : vector<8x128xf32>
    %24 = tpu.iota {dimensions = array<i32: 1>} : vector<8x128xi32>
    %c128_i32 = arith.constant 128 : i32
    %25 = arith.muli %arg1, %c128_i32 : i32
    %26 = vector.broadcast %25 : i32 to vector<8x128xi32>
    %27 = arith.addi %24, %26 : vector<8x128xi32>
    %c0_10 = arith.constant 0 : index
    %c0_11 = arith.constant 0 : index
    %28 = vector.load %arg5[%c0_10, %c0_11] : memref<8x1xi32, #tpu.memory_space<vmem>>, vector<8x1xi32>
    %29 = vector.broadcast %28 : vector<8x1xi32> to vector<8x128xi32>
    %30 = arith.cmpi eq, %27, %29 : vector<8x128xi32>
    %cst_12 = arith.constant 0.000000e+00 : f32
    %31 = vector.broadcast %cst_12 : f32 to vector<8x128xf32>
    %32 = arith.select %30, %23, %31 : vector<8x128xi1>, vector<8x128xf32>
    %cst_13 = arith.constant dense<0.000000e+00> : vector<8xf32>
    %33 = vector.multi_reduction <add>, %32, %cst_13 [1] : vector<8x128xf32> to vector<8xf32>
    %34 = vector.shape_cast %33 : vector<8xf32> to vector<8x1xf32>
    %c0_14 = arith.constant 0 : index
    %c0_15 = arith.constant 0 : index
    %35 = vector.load %arg12[%c0_14, %c0_15] : memref<8x1xf32, #tpu.memory_space<vmem>>, vector<8x1xf32>
    %36 = arith.addf %35, %34 : vector<8x1xf32>
    %c0_16 = arith.constant 0 : index
    %c0_17 = arith.constant 0 : index
    %37 = vector.load %arg12[%c0_16, %c0_17] : memref<8x1xf32, #tpu.memory_space<vmem>>, vector<8x1xf32>
    tpu.vector_store %arg12[%c0_16, %c0_17], %36 {strides = array<i32>} : memref<8x1xf32, #tpu.memory_space<vmem>>, vector<8x1xf32>,
    %cst_18 = arith.constant 3.500000e-01 : f32
    %38 = vector.broadcast %cst_18 : f32 to vector<8x128xf32>
    %39 = arith.addf %23, %38 : vector<8x128xf32>
    %cst_19 = arith.constant 0.000000e+00 : f32
    %40 = vector.broadcast %cst_19 : f32 to vector<8x128xf32>
    %41 = arith.maximumf %39, %40 : vector<8x128xf32>
    %cst_20 = arith.constant 3.500000e-01 : f32
    %42 = vector.broadcast %cst_20 : f32 to vector<8x128xf32>
    %43 = arith.subf %23, %42 : vector<8x128xf32>
    %44 = arith.mulf %41, %43 : vector<8x128xf32>
    %cst_21 = arith.constant 1.000000e+00 : f32
    %cst_22 = arith.constant 3.500000e-01 : f32
    %45 = arith.addf %cst_21, %cst_22 : f32
    %46 = vector.broadcast %45 : f32 to vector<8x1xf32>
    %47 = arith.subf %46, %34 : vector<8x1xf32>
    %cst_23 = arith.constant 0.000000e+00 : f32
    %48 = vector.broadcast %cst_23 : f32 to vector<8x1xf32>
    %49 = arith.maximumf %47, %48 : vector<8x1xf32>
    %cst_24 = arith.constant 1.000000e+00 : f32
    %cst_25 = arith.constant 3.500000e-01 : f32
    %50 = arith.subf %cst_24, %cst_25 : f32
    %51 = vector.broadcast %50 : f32 to vector<8x1xf32>
    %52 = arith.subf %34, %51 : vector<8x1xf32>
    %53 = arith.mulf %49, %52 : vector<8x1xf32>
    %54 = vector.shape_cast %53 : vector<8x1xf32> to vector<8x1xf32>
    %55 = vector.broadcast %54 : vector<8x1xf32> to vector<8x128xf32>
    %56 = arith.select %30, %55, %44 : vector<8x128xi1>, vector<8x128xf32>
    %cst_26 = arith.constant 2.560000e+02 : f32
    %57 = vector.broadcast %cst_26 : f32 to vector<8x128xf32>
    %58 = arith.mulf %57, %56 : vector<8x128xf32>
    %c0_27 = arith.constant 0 : index
    %c0_28 = arith.constant 0 : index
    %59 = vector.load %arg4[%c0_27, %c0_28] : memref<1x128xf32, #tpu.memory_space<vmem>>, vector<1x128xf32>
    %60 = vector.broadcast %59 : vector<1x128xf32> to vector<8x128xf32>
    %61 = arith.addf %58, %60 : vector<8x128xf32>
    %cst_29 = arith.constant dense<0xFF800000> : vector<8xf32>
    %62 = vector.multi_reduction <maximumf>, %61, %cst_29 [1] : vector<8x128xf32> to vector<8xf32>
    %63 = vector.shape_cast %62 : vector<8xf32> to vector<8x1xf32>
    %c0_30 = arith.constant 0 : index
    %c0_31 = arith.constant 0 : index
    %64 = vector.load %arg10[%c0_30, %c0_31] : memref<8x1xf32, #tpu.memory_space<vmem>>, vector<8x1xf32>
    %65 = vector.broadcast %63 : vector<8x1xf32> to vector<8x128xf32>
    %66 = arith.cmpf oge, %61, %65 : vector<8x128xf32>
    %c1073741824_i32 = arith.constant 1073741824 : i32
    %67 = vector.broadcast %c1073741824_i32 : i32 to vector<8x128xi32>
    %68 = arith.select %66, %27, %67 : vector<8x128xi1>, vector<8x128xi32>
    %cst_32 = arith.constant dense<2147483647> : vector<8xi32>
    %69 = vector.multi_reduction <minsi>, %68, %cst_32 [1] : vector<8x128xi32> to vector<8xi32>
    %70 = vector.shape_cast %69 : vector<8xi32> to vector<8x1xi32>
    %71 = arith.cmpf ogt, %63, %64 : vector<8x1xf32>
    %c0_33 = arith.constant 0 : index
    %c0_34 = arith.constant 0 : index
    %72 = vector.load %arg13[%c0_33, %c0_34] : memref<8x1xi32, #tpu.memory_space<vmem>>, vector<8x1xi32>
    %73 = arith.select %71, %70, %72 : vector<8x1xi1>, vector<8x1xi32>
    %c0_35 = arith.constant 0 : index
    %c0_36 = arith.constant 0 : index
    %74 = vector.load %arg13[%c0_35, %c0_36] : memref<8x1xi32, #tpu.memory_space<vmem>>, vector<8x1xi32>
    tpu.vector_store %arg13[%c0_35, %c0_36], %73 {strides = array<i32>} : memref<8x1xi32, #tpu.memory_space<vmem>>, vector<8x1xi32>,
    %75 = arith.maximumf %64, %63 : vector<8x1xf32>
    %c0_37 = arith.constant 0 : index
    %c0_38 = arith.constant 0 : index
    %76 = vector.load %arg11[%c0_37, %c0_38] : memref<8x1xf32, #tpu.memory_space<vmem>>, vector<8x1xf32>
    %77 = arith.subf %64, %75 : vector<8x1xf32>
    %78 = math.exp %77 : vector<8x1xf32>
    %79 = arith.mulf %76, %78 : vector<8x1xf32>
    %80 = vector.broadcast %75 : vector<8x1xf32> to vector<8x128xf32>
    %81 = arith.subf %61, %80 : vector<8x128xf32>
    %82 = math.exp %81 : vector<8x128xf32>
    %cst_39 = arith.constant dense<0.000000e+00> : vector<8xf32>
    %83 = vector.multi_reduction <add>, %82, %cst_39 [1] : vector<8x128xf32> to vector<8xf32>
    %84 = vector.shape_cast %83 : vector<8xf32> to vector<8x1xf32>
    %85 = arith.addf %79, %84 : vector<8x1xf32>
    %c0_40 = arith.constant 0 : index
    %c0_41 = arith.constant 0 : index
    %86 = vector.load %arg11[%c0_40, %c0_41] : memref<8x1xf32, #tpu.memory_space<vmem>>, vector<8x1xf32>
    tpu.vector_store %arg11[%c0_40, %c0_41], %85 {strides = array<i32>} : memref<8x1xf32, #tpu.memory_space<vmem>>, vector<8x1xf32>,
    %c0_42 = arith.constant 0 : index
    %c0_43 = arith.constant 0 : index
    %87 = vector.load %arg10[%c0_42, %c0_43] : memref<8x1xf32, #tpu.memory_space<vmem>>, vector<8x1xf32>
    tpu.vector_store %arg10[%c0_42, %c0_43], %75 {strides = array<i32>} : memref<8x1xf32, #tpu.memory_space<vmem>>, vector<8x1xf32>,
    %c0_i32_44 = arith.constant 0 : i32
    %88 = arith.cmpi eq, %arg1, %c0_i32_44 : i32
    %89 = arith.extui %88 : i1 to i32
    %cst_45 = arith.constant 3.500000e-01 : f32
    %cst_46 = arith.constant 2.560000e+02 : f32
    %c0_i32_47 = arith.constant 0 : i32
    %90 = arith.cmpi ne, %89, %c0_i32_47 : i32
    scf.if %90 {
      %c0_48 = arith.constant 0 : index
      %c0_49 = arith.constant 0 : index
      %91 = vector.load %arg10[%c0_48, %c0_49] : memref<8x1xf32, #tpu.memory_space<vmem>>, vector<8x1xf32>
      %c0_50 = arith.constant 0 : index
      %c0_51 = arith.constant 0 : index
      %92 = vector.load %arg11[%c0_50, %c0_51] : memref<8x1xf32, #tpu.memory_space<vmem>>, vector<8x1xf32>
      %93 = math.log %92 : vector<8x1xf32>
      %94 = arith.addf %91, %93 : vector<8x1xf32>
      %c0_52 = arith.constant 0 : index
      %c0_53 = arith.constant 0 : index
      %95 = vector.load %arg12[%c0_52, %c0_53] : memref<8x1xf32, #tpu.memory_space<vmem>>, vector<8x1xf32>
      %cst_54 = arith.constant 1.000000e+00 : f32
      %96 = arith.addf %cst_54, %cst_45 : f32
      %97 = vector.broadcast %96 : f32 to vector<8x1xf32>
      %98 = arith.subf %97, %95 : vector<8x1xf32>
      %cst_55 = arith.constant 0.000000e+00 : f32
      %99 = vector.broadcast %cst_55 : f32 to vector<8x1xf32>
      %100 = arith.maximumf %98, %99 : vector<8x1xf32>
      %101 = vector.broadcast %cst_46 : f32 to vector<8x1xf32>
      %102 = arith.mulf %101, %100 : vector<8x1xf32>
      %cst_56 = arith.constant 1.000000e+00 : f32
      %103 = arith.subf %cst_56, %cst_45 : f32
      %104 = vector.broadcast %103 : f32 to vector<8x1xf32>
      %105 = arith.subf %95, %104 : vector<8x1xf32>
      %106 = arith.mulf %102, %105 : vector<8x1xf32>
      %107 = arith.subf %94, %106 : vector<8x1xf32>
      %c0_57 = arith.constant 0 : index
      %c0_58 = arith.constant 0 : index
      %108 = vector.load %arg6[%c0_57, %c0_58] : memref<8x1xf32, #tpu.memory_space<vmem>>, vector<8x1xf32>
      tpu.vector_store %arg6[%c0_57, %c0_58], %107 {strides = array<i32>} : memref<8x1xf32, #tpu.memory_space<vmem>>, vector<8x1xf32>,
      %c0_59 = arith.constant 0 : index
      %c0_60 = arith.constant 0 : index
      %109 = vector.load %arg13[%c0_59, %c0_60] : memref<8x1xi32, #tpu.memory_space<vmem>>, vector<8x1xi32>
      %c0_61 = arith.constant 0 : index
      %c0_62 = arith.constant 0 : index
      %110 = vector.load %arg7[%c0_61, %c0_62] : memref<8x1xi32, #tpu.memory_space<vmem>>, vector<8x1xi32>
      tpu.vector_store %arg7[%c0_61, %c0_62], %109 {strides = array<i32>} : memref<8x1xi32, #tpu.memory_space<vmem>>, vector<8x1xi32>,
    } else {
    }
    return
  }
  func.func @transform_0(%arg0: i32, %arg1: i32) -> (i32, i32) {
    %c0_i32 = arith.constant 0 : i32
    %c0_i32_0 = arith.constant 0 : i32
    return %arg0, %c0_i32 : i32, i32
  }
  func.func @transform_1(%arg0: i32, %arg1: i32) -> (i32, i32) {
    %c0_i32 = arith.constant 0 : i32
    %c0_i32_0 = arith.constant 0 : i32
    return %c0_i32, %arg1 : i32, i32
  }
  func.func @transform_2(%arg0: i32, %arg1: i32) -> (i32, i32) {
    %c0_i32 = arith.constant 0 : i32
    %c0_i32_0 = arith.constant 0 : i32
    return %c0_i32, %arg1 : i32, i32
  }
  func.func @transform_3(%arg0: i32, %arg1: i32) -> (i32, i32) {
    %c0_i32 = arith.constant 0 : i32
    %c0_i32_0 = arith.constant 0 : i32
    return %arg0, %c0_i32 : i32, i32
  }
  func.func @transform_4(%arg0: i32, %arg1: i32) -> (i32, i32) {
    %c0_i32 = arith.constant 0 : i32
    %c0_i32_0 = arith.constant 0 : i32
    return %arg0, %c0_i32 : i32, i32
  }
  func.func @transform_5(%arg0: i32, %arg1: i32) -> (i32, i32) {
    %c0_i32 = arith.constant 0 : i32
    %c0_i32_0 = arith.constant 0 : i32
    return %arg0, %c0_i32 : i32, i32
  }
}

</mosaic_0001>

<llo_original>
// kernel: tpu_custom_call.1
$region0: #{tpu_custom_call.1}
  #allocation0 [shape = 'u32[]', space=smem, size = 0x4, offset = 0x4, fixed_abs, tag = 'smem constant byte address 0x4 - core index']
  #allocation1 [shape = 'u32[72,128]{1,0:T(1,128)}', space=vmem, size = 0x9000, scoped, tag = 'internal scratch']
  #allocation2 [shape = 'f32[8,1]{1,0:T(8,128)}', space=vmem, size = 0x1000, scoped, tag = 'scratch operand']
  #allocation3 [shape = 'bf16[8,32]{1,0:T(8,128)(2,1)}', space=vmem, size = 0x800, scoped, tag = 'scratch operand']
  #allocation4 [shape = 'f32[8,1]{1,0:T(8,128)}', space=vmem, size = 0x1000, scoped, tag = 'scratch operand']
  #allocation5 [shape = 'f32[8,1]{1,0:T(8,128)}', space=vmem, size = 0x1000, scoped, tag = 'scratch operand']
  #allocation6 [shape = 'f32[8,1]{1,0:T(8,128)}', space=vmem, size = 0x1000, scoped, tag = 'scratch operand']
  #allocation7 [shape = 's32[8,1]{1,0:T(8,128)}', space=vmem, size = 0x1000, scoped, tag = 'scratch operand']
  %s0 = inlined_call_operand.vmem [shape: f32[8,32], index: 0, kind: input, shape index: {}]
  %s1 = inlined_call_operand.hbm [shape: f32[32,128], index: 1, kind: input, shape index: {}]
  %s2 = inlined_call_operand.vmem [shape: f32[1,128], index: 2, kind: input, shape index: {}]
  %s3 = inlined_call_operand.vmem [shape: s32[8,1], index: 3, kind: input, shape index: {}]
  %s4 = inlined_call_operand.vmem [shape: f32[8,1], index: 4, kind: output, shape index: {0}]
  %s5 = inlined_call_operand.vmem [shape: s32[8,1], index: 5, kind: output, shape index: {1}]
  %6 = xla_tuple %s4, %s5
  %s7 = sld [smem:[#allocation0]]
  $region46: #{tpu_custom_call.1} parent=0
    _
  %s9 = ssub.s32 1, %s7
  %s10 = scalar_select 0, %s9, %s7
  $region1: #{tpu_custom_call.1} parent=0
    #allocation8 [shape = 'u8[16384]{0}', space=vmem, size = 0x4000, scoped, tag = 'input window, operand 1, single buffered']
    #allocation9 [shape = 's32[1]{0}', space=sflag, size = 0x4, scoped, tag = 'scoped memory for tpu_custom_call.1']
    %11 = vsyncpa [#allocation9], 0
    // Predicated region
    $region2: #{tpu_custom_call.1} parent=1 // pred_check
      _
    $region3: #{tpu_custom_call.1} parent=1 // pred_check_branch
      %13 = sbr.rel (0) target = $region5
    $region4: #{tpu_custom_call.1} parent=1 // pred_region
      _
    $region5: #{tpu_custom_call.1} parent=1 // pred_fallthru
      _
    // Predicated region
    $region6: #{tpu_custom_call.1} parent=1 // pred_check
      _
    $region7: #{tpu_custom_call.1} parent=1 // pred_check_branch
      %15 = sbr.rel (0) target = $region9
    $region8: #{tpu_custom_call.1} parent=1 // pred_region
      %17 = vsyncadd [#allocation9], 0
      %s18 = sshll.u32 %s1, 4
      %s19 = int_to_ptr.hbm [resolvable:$true] %s18
      %s20 = sshll.u32 [#allocation8], 4
      %s21 = int_to_ptr.vmem [resolvable:$true] %s20
      %26 = dma.hbm_to_vmem [thread:$0]  %s19, 512, %s21, [#allocation9], 128, 128, 8
    $region9: #{tpu_custom_call.1} parent=1 // pred_fallthru
      _
    // Predicated region
    $region10: #{tpu_custom_call.1} parent=1 // pred_check
      _
    $region11: #{tpu_custom_call.1} parent=1 // pred_check_branch
      %28 = sbr.rel (0) target = $region13
    $region12: #{tpu_custom_call.1} parent=1 // pred_region
      _
    $region13: #{tpu_custom_call.1} parent=1 // pred_fallthru
      _
    // Predicated region
    $region14: #{tpu_custom_call.1} parent=1 // pred_check
      _
    $region15: #{tpu_custom_call.1} parent=1 // pred_check_branch
      %30 = sbr.rel (0) target = $region17
    $region16: #{tpu_custom_call.1} parent=1 // pred_region
      _
    $region17: #{tpu_custom_call.1} parent=1 // pred_fallthru
      _
    // Predicated region
    $region18: #{tpu_custom_call.1} parent=1 // pred_check
      _
    $region19: #{tpu_custom_call.1} parent=1 // pred_check_branch
      %32 = sbr.rel (0) target = $region21
    $region20: #{tpu_custom_call.1} parent=1 // pred_region
      %34 = dma.done [#allocation9], 512
    $region21: #{tpu_custom_call.1} parent=1 // pred_fallthru
      _
    %p36 = scmp.eq.s32.totalorder 0, 0
    // Predicated region
    $region22: #{tpu_custom_call.1} parent=1 // pred_check
      %p37 = pneg %p36
    $region23: #{tpu_custom_call.1} parent=1 // pred_check_branch
      %39 = sbr.rel (%p37) target = $region25
    $region24: #{tpu_custom_call.1} parent=1 // pred_region
      %v40 = vld [vmem:[%s0] sm:$0xff]
      %v41 = vmul.f32 %v40, %v40
      %vm42 = vcmask 261120
      %v43 = vsel %vm42, %v41, 0.0
      %44 = vadd.xlane.f32.xlu0 %v43
      %v45 = vpop.xlane.xlu0 %44
      %v46 = vrsqrt.pop %v45
      %v47 = vmul.f32 %v46, %v45
      %v48 = vmul.f32 %v47, %v46
      %v49 = vmul.f32 0.5, %v48
      %v50 = vsub.f32 1.5, %v49
      %v51 = vmul.f32 %v46, %v50
      %v52 = vmul.f32 %v45, %v51
      %vm53 = vcmp.eq.f32.partialorder %v45, inf
      %v54 = vsel %vm53, %v45, %v52
      %vm55 = vcmp.eq.f32.partialorder %v45, 0.0
      %v56 = vand.u32 %v45, 2147483648
      %v57 = vsel %vm55, %v56, %v54
      %vm58 = vcmask 7168
      %59 = vst.msk [vmem:[#allocation2] sm:$0xff] %vm58, %v57
      %v60 = vpack.c.bf16 %v40, %v40
      %vm61 = vcmask 257024
      %62 = vst.msk [vmem:[#allocation3] sm:$0xf] %vm61, %v60
      %63 = vst.msk [vmem:[#allocation4] sm:$0xff] %vm58, -1e+30
      %64 = vst.msk [vmem:[#allocation5] sm:$0xff] %vm58, 0.0
      %65 = vst.msk [vmem:[#allocation6] sm:$0xff] %vm58, 0.0
      %66 = vst.msk [vmem:[#allocation7] sm:$0xff] %vm58, 0
    $region25: #{tpu_custom_call.1} parent=1 // pred_fallthru
      _
    %v67 = vld [vmem:[#allocation8] sm:$0xff]
    %v68 = vld [vmem:[#allocation8 + $0x8] sm:$0xff]
    %v69 = vld [vmem:[#allocation8 + $0x10] sm:$0xff]
    %v70 = vld [vmem:[#allocation8 + $0x18] sm:$0xff]
    %v71 = vmul.f32 %v67, %v67
    %v72 = vmul.f32 %v68, %v68
    %v73 = vmul.f32 %v69, %v69
    %v74 = vmul.f32 %v70, %v70
    %v75 = vadd.f32 %v71, %v72
    %v76 = vadd.f32 %v75, %v73
    %v77 = vadd.f32 %v76, %v74
    %v78 = vrot.slane %v77, 4
    %v79 = vadd.f32 %v77, %v78
    %v80 = vrot.slane %v79, 2
    %v81 = vadd.f32 %v79, %v80
    %v82 = vrot.slane %v81, 1
    %v83 = vadd.f32 %v81, %v82
    %vm84 = vcmp.gt.f32.partialorder %v83, 0.0
    %v85 = vrsqrt.pop %v83
    %v86 = vmul.f32 %v85, %v83
    %v87 = vmul.f32 %v86, %v85
    %v88 = vmul.f32 0.5, %v87
    %v89 = vsub.f32 1.5, %v88
    %v90 = vmul.f32 %v85, %v89
    %vm91 = vweird.f32 %v83
    %vm92 = vweird.f32 %v85
    %vm93 = vmor %vm91, %vm92
    %v94 = vsel %vm93, %v85, %v90
    %v95 = vsel %vm84, %v94, 0.0
    %v96 = vld [vmem:[#allocation3] sm:$0xf]
    %v97 = vpack.c.bf16 %v68, %v67
    %v98 = vpack.c.bf16 %v70, %v69
    %vm99 = vcmask 261120
    %v101 = vsel %vm99, %v96, 0
    %103 = vmatpush.bf16.msra.mxu0 0
    %104 = vmatpush.bf16.msra.mxu0 0
    %105 = vmatpush.bf16.msra.mxu0 0
    %106 = vmatpush.bf16.msra.mxu0 0
    %107 = vmatpush.bf16.msra.mxu0 0
    %108 = vmatpush.bf16.msra.mxu0 0
    %109 = vmatpush.bf16.msra.mxu0 %v98
    %110 = vmatpush.bf16.msra.mxu0 %v97
    %111 = vmatmul.bf16.gmra.mxu0 %v101
    %v112 = vpop.f32.mrf.mxu0
    %v113 = vadd.f32 0.0, %v112
    %v114 = vpop.f32.mrf.mxu0
    %115 = vdwg.mxu0
    %v116 = vld [vmem:[#allocation2] sm:$0xff]
    %v117 = vmul.f32 %v113, %v95
    %v118 = vsub.f32 0.0, %v116
    %120 = vset.pattern.permute.xlu0 0
    %121 = vperm.xlu0 %120, %v118
    %v122 = vpop.permute.xlu0 %121
    %v124 = vmax.f32 %v122, %v117
    %126 = vset.pattern.permute.xlu0 0
    %127 = vperm.xlu0 %126, %v116
    %v128 = vpop.permute.xlu0 %127
    %v130 = vmin.f32 %v128, %v124
    %v131 = vlaneseq
    %v132 = vand.u32 %v131, 127
    %s133 = smul.u32 0, 128
    %v134 = vstv %s133
    %v135 = vadd.s32 %v132, %v134
    %v136 = vld [vmem:[%s3] sm:$0xff]
    %137 = vset.pattern.permute.xlu0 0
    %138 = vperm.xlu0 %137, %v136
    %v139 = vpop.permute.xlu0 %138
    %vm140 = vcmp.eq.s32.totalorder %v135, %v139
    %v141 = vsel %vm140, %v130, 0.0
    %142 = vadd.xlane.f32.xlu0 %v141
    %v143 = vpop.xlane.xlu0 %142
    %v144 = vld [vmem:[#allocation6] sm:$0xff]
    %v145 = vadd.f32 %v144, %v143
    %vm146 = vcmask 7168
    %147 = vst.msk [vmem:[#allocation6] sm:$0xff] %vm146, %v145
    %v148 = vadd.f32 %v130, 0.35
    %v149 = vmax.f32 %v148, 0.0
    %v150 = vsub.f32 %v130, 0.35
    %v151 = vmul.f32 %v149, %v150
    %v152 = vsub.f32 1.35, %v143
    %v153 = vmax.f32 %v152, 0.0
    %v154 = vsub.f32 %v143, 0.65
    %v155 = vmul.f32 %v153, %v154
    %v156 = vsel %vm140, %v155, %v151
    %v157 = vmul.f32 %v156, 256.0
    %v158 = vld [vmem:[%s2] sm:$0x1]
    %v160 = vperm.slane %v158, 0
    %v162 = vadd.f32 %v157, %v160
    %163 = vmax.xlane.f32.xlu0 %v162
    %v164 = vpop.xlane.xlu0 %163
    %v165 = vld [vmem:[#allocation4] sm:$0xff]
    %vm166 = vcmp.ge.f32.partialorder %v162, %v164
    %v167 = vsel %vm166, %v135, 1073741824
    %v168 = vand.u32 %v167, 65535
    %v169 = vshra.s32 %v167, 16
    %v170 = vcvt.s32.f32 %v168
    %v171 = vcvt.s32.f32 %v169
    %172 = vmin.xlane.f32.xlu0 %v171
    %v173 = vpop.xlane.xlu0 %172
    %vm174 = vcmp.eq.f32.partialorder %v171, %v173
    %v175 = vsel %vm174, %v170, inf
    %176 = vmin.xlane.f32.xlu0 %v175
    %v177 = vpop.xlane.xlu0 %176
    %v178 = vcvt.f32.s32 %v177
    %v179 = vcvt.f32.s32 %v173
    %v180 = vshll.u32 %v179, 16
    %v181 = vadd.s32 %v180, %v178
    %vm182 = vcmp.gt.f32.partialorder %v164, %v165
    %v183 = vld [vmem:[#allocation7] sm:$0xff]
    %v184 = vsel %vm182, %v181, %v183
    %185 = vst.msk [vmem:[#allocation7] sm:$0xff] %vm146, %v184
    %v186 = vmax.f32 %v165, %v164
    %v187 = vld [vmem:[#allocation5] sm:$0xff]
    %v188 = vsub.f32 %v165, %v186
    %v189 = vmul.f32 %v188, 1.442695
    %v190 = vpow.pop %v189
    %v191 = vmul.f32 %v187, %v190
    %193 = vset.pattern.permute.xlu0 0
    %194 = vperm.xlu0 %193, %v186
    %v195 = vpop.permute.xlu0 %194
    %v197 = vsub.f32 %v162, %v195
    %v198 = vmul.f32 %v197, 1.442695
    %v199 = vpow.pop %v198
    %200 = vadd.xlane.f32.xlu0 %v199
    %v201 = vpop.xlane.xlu0 %200
    %v202 = vadd.f32 %v191, %v201
    %203 = vst.msk [vmem:[#allocation5] sm:$0xff] %vm146, %v202
    %204 = vst.msk [vmem:[#allocation4] sm:$0xff] %vm146, %v186
    // Predicated region
    $region26: #{tpu_custom_call.1} parent=1 // pred_check
      %p205 = pneg %p36
    $region27: #{tpu_custom_call.1} parent=1 // pred_check_branch
      %207 = sbr.rel (%p205) target = $region29
    $region28: #{tpu_custom_call.1} parent=1 // pred_region
      %v208 = vld [vmem:[#allocation4] sm:$0xff]
      %v209 = vld [vmem:[#allocation5] sm:$0xff]
      %v210 = vlog2.pop %v209
      %v211 = vmul.f32 %v210, 0.6931472
      %v212 = vadd.f32 %v208, %v211
      %v213 = vld [vmem:[#allocation6] sm:$0xff]
      %v214 = vsub.f32 1.35, %v213
      %v215 = vmax.f32 %v214, 0.0
      %v216 = vmul.f32 %v215, 256.0
      %v217 = vsub.f32 %v213, 0.65
      %v218 = vmul.f32 %v216, %v217
      %v219 = vsub.f32 %v212, %v218
      %220 = vst.msk [vmem:[%s4] sm:$0xff] %vm146, %v219
      %v221 = vld [vmem:[#allocation7] sm:$0xff]
      %222 = vst.msk [vmem:[%s5] sm:$0xff] %vm146, %v221
    $region29: #{tpu_custom_call.1} parent=1 // pred_fallthru
      _
    // Predicated region
    $region30: #{tpu_custom_call.1} parent=1 // pred_check
      _
    $region31: #{tpu_custom_call.1} parent=1 // pred_check_branch
      %224 = sbr.rel (0) target = $region33
    $region32: #{tpu_custom_call.1} parent=1 // pred_region
      _
    $region33: #{tpu_custom_call.1} parent=1 // pred_fallthru
      _
    // Predicated region
    $region34: #{tpu_custom_call.1} parent=1 // pred_check
      _
    $region35: #{tpu_custom_call.1} parent=1 // pred_check_branch
      %226 = sbr.rel (0) target = $region37
    $region36: #{tpu_custom_call.1} parent=1 // pred_region
      _
    $region37: #{tpu_custom_call.1} parent=1 // pred_fallthru
      _
    // Predicated region
    $region38: #{tpu_custom_call.1} parent=1 // pred_check
      _
    $region39: #{tpu_custom_call.1} parent=1 // pred_check_branch
      %228 = sbr.rel (0) target = $region41
    $region40: #{tpu_custom_call.1} parent=1 // pred_region
      _
    $region41: #{tpu_custom_call.1} parent=1 // pred_fallthru
      _
    // Predicated region
    $region42: #{tpu_custom_call.1} parent=1 // pred_check
      _
    $region43: #{tpu_custom_call.1} parent=1 // pred_check_branch
      %230 = sbr.rel (0) target = $region45
    $region44: #{tpu_custom_call.1} parent=1 // pred_region
      _
    $region45: #{tpu_custom_call.1} parent=1 // pred_fallthru
      _
    %231 = vsyncpa [#allocation9], 1

</llo_original>
